<compile_context>
chip_gen: v6e
topology: v6e:2x2x1
jax: 0.10.0
libtpu: 0.0.40
codegen_flags: <defaults>
</compile_context>

<pallas_src>
import functools

import jax
import jax.numpy as jnp
from jax.experimental import pallas as pl
from jax.experimental.pallas import tpu as pltpu

_LANES = 128
_SUBLANES = 8
_TARGET_TILE_BYTES = 2 << 20  # ~2 MiB logits per grid step: step overhead << DMA time


def _cdiv(a, b):
    return (a + b - 1) // b


def _round_up(x, m):
    return _cdiv(x, m) * m


def _vmem_capacity_bytes():
    try:
        return int(pltpu.get_tpu_info().vmem_capacity_bytes)
    except Exception:
        return 64 << 20  # conservative: v7x per-TC VMEM


def _choose_row_tile(n, c, itemsize, *, budget_bytes, sublane):
    """Row tile for the (N, C) logits, byte-targeted and VMEM-budgeted."""
    # Bytes one row occupies in VMEM: logits row + lane-padded (1->128, 4 B) label row.
    per_row_bytes = c * itemsize + _LANES * 4
    # (a) VMEM bound: inputs are double-buffered by the Pallas pipeline.
    tn_vmem = budget_bytes // (2 * per_row_bytes)
    # (b) byte target: ~2 MiB of logits per step (recovers the measured 85%+ of
    #     HBM roofline instead of being per-step-overhead-bound for small C).
    tn_target = _TARGET_TILE_BYTES // max(1, c * itemsize)
    # (c) no bigger than the (sublane-rounded) data ...
    tn_data = _round_up(n, sublane)
    # (d) ... but keep >= ~4 tiles when the data allows, so the pipeline
    #     overlaps and v7x's two TensorCores both get work.
    tn_tiles = _round_up(_cdiv(n, 4), sublane)
    tn = min(tn_vmem, tn_target, tn_data, tn_tiles)
    tn = max(sublane, tn // sublane * sublane)
    return tn


def _topk_error_partial_kernel(labels_ref, outputs_ref, partial_ref, *, k, n_total, tn):
    """One grid step: count rows of this tile whose label is in the top-k.

    The per-tile count is splat into a full (1, 8, 128) output block, so the
    store is an unmasked full-vreg write and each grid step owns a distinct
    output block (=> grid axis stays 'parallel', no carried state).
    """
    i = pl.program_id(0)

    labels = labels_ref[...]            # (TN, 1) int32
    scores = outputs_ref[...]           # (TN, C) native float dtype (no wrapper upcast)

    # Label score via iota one-hot + masked max (avoids a gather).
    col_ids = jax.lax.broadcasted_iota(jnp.int32, scores.shape, 1)        # (TN, C)
    is_label = col_ids == labels                                          # (TN, C)
    neg_inf = jnp.array(-jnp.inf, dtype=scores.dtype)
    label_score = jnp.max(jnp.where(is_label, scores, neg_inf),
                          axis=-1, keepdims=True)                         # (TN, 1)

    # rank = #scores strictly greater than the label's score; in top-k iff rank < k.
    higher = jnp.sum((scores > label_score).astype(jnp.int32),
                     axis=-1, keepdims=True)                              # (TN, 1)
    correct_f = (higher < k).astype(jnp.float32)                          # (TN, 1)

    def _store(partial):
        # Full-block splat store (lane-dense, unmasked vst).
        partial_ref[...] = jnp.zeros(partial_ref.shape, jnp.float32) + partial

    if n_total % tn != 0:
        # Only the LAST tile overhangs the array (unspecified data in the
        # overhang rows): gate the row-validity mask to that tile alone.
        last = pl.num_programs(0) - 1

        @pl.when(i == last)
        def _():
            row_ids = i * tn + jax.lax.broadcasted_iota(jnp.int32, (tn, 1), 0)
            _store(jnp.sum(jnp.where(row_ids < n_total, correct_f, 0.0)))

        @pl.when(i != last)
        def _():
            _store(jnp.sum(correct_f))
    else:
        # Static: every tile is fully in-bounds, no mask work at all.
        _store(jnp.sum(correct_f))


def topk_error(labels, outputs, *, k=1, percent=True):
    """Pallas TPU implementation of TopKError.forward.

    Returns a 0-d jnp.float32 device scalar (call float()/.item() only when a
    host value is actually needed, to avoid a device->host sync per call).
    """
    labels = jnp.squeeze(labels)
    outputs = jnp.squeeze(outputs)
    assert outputs.ndim == 2 and labels.ndim == 1
    n, c = outputs.shape
    assert labels.shape[0] == n

    # Stream logits in their native float dtype (bf16 stays bf16: half the HBM
    # traffic of a wrapper-side upcast).  Non-float inputs fall back to f32.
    if not jnp.issubdtype(outputs.dtype, jnp.floating):
        outputs = outputs.astype(jnp.float32)

    itemsize = jnp.dtype(outputs.dtype).itemsize
    sublane = max(_SUBLANES, 32 // itemsize)        # 8 f32 / 16 bf16 / 32 int8-fp8

    vmem_cap = _vmem_capacity_bytes()
    budget = min(48 << 20, vmem_cap * 3 // 8)       # ~48 MiB on 128 MiB VMEM, ~24 MiB on 64 MiB
    tn = _choose_row_tile(n, c, itemsize, budget_bytes=budget, sublane=sublane)
    num_tiles = _cdiv(n, tn)

    # No padding: the last tile overhangs and the kernel masks its rows.
    labels_2d = labels.astype(jnp.int32).reshape(n, 1)

    # Scoped-VMEM limit sized to the actual footprint (double-buffered inputs
    # + double-buffered (1,8,128) output + headroom for Mosaic scratch).
    in_bytes = 2 * tn * (c * itemsize + _LANES * 4)
    out_bytes = 2 * _SUBLANES * _LANES * 4
    vmem_limit = min(vmem_cap * 3 // 4, max(16 << 20, in_bytes + out_bytes + (4 << 20)))

    kernel = functools.partial(_topk_error_partial_kernel, k=k, n_total=n, tn=tn)

    partials = pl.pallas_call(
        kernel,
        out_shape=jax.ShapeDtypeStruct((num_tiles, _SUBLANES, _LANES), jnp.float32),
        grid_spec=pltpu.PrefetchScalarGridSpec(
            num_scalar_prefetch=0,
            grid=(num_tiles,),
            in_specs=[
                pl.BlockSpec((tn, 1), lambda i: (i, 0)),        # labels tile
                pl.BlockSpec((tn, c), lambda i: (i, 0)),        # logits tile
            ],
            out_specs=pl.BlockSpec((1, _SUBLANES, _LANES), lambda i: (i, 0, 0)),
        ),
        compiler_params=pltpu.CompilerParams(
            # Each tile writes its own partial -> fully independent grid steps
            # (lets v7x spread tiles over both TensorCores).
            dimension_semantics=("parallel",),
            vmem_limit_bytes=int(vmem_limit),
        ),
    )(labels_2d, outputs)

    # Per-tile partials are small exact integers in f32; sum them in int32 so
    # the total stays exact for arbitrarily large N.
    total_correct = jnp.sum(partials[:, 0, 0].astype(jnp.int32))
    acc = total_correct.astype(jnp.float32) / jnp.float32(n)
    err = jnp.float32(1.0) - acc
    if percent:
        err = jnp.float32(100.0) * err
    return err


def _reference_topk_error(labels, outputs, *, k=1, percent=True):
    labels = jnp.squeeze(labels)
    outputs = jnp.squeeze(outputs)
    _, topk = jax.lax.top_k(outputs, k)
    correct = jnp.any(topk == labels[:, None], axis=-1).astype(jnp.float32)
    acc = jnp.mean(correct)
    err = 1.0 - acc
    return float(100.0 * err if percent else err)


if __name__ == "__main__":
    key = jax.random.PRNGKey(0)
    k1_lab, k1_out, k2_lab, k2_out, k3_lab, k3_out = jax.random.split(key, 6)

    # Case 1: module defaults (k=1, percent=True), batch=16, classes=32.
    N1, C1 = 16, 32
    outputs1 = jax.random.normal(k1_out, (N1, C1), dtype=jnp.float32)
    labels1 = jax.random.randint(k1_lab, (N1,), 0, C1, dtype=jnp.int32)
    err1 = topk_error(labels1, outputs1, k=1, percent=True)
    jax.block_until_ready(err1)
    ref1 = _reference_topk_error(labels1, outputs1, k=1, percent=True)
    assert abs(float(err1) - ref1) < 1e-4, (float(err1), ref1)

    # Case 2: k=3, row count not a multiple of the tile (exercises the
    # no-pad overhanging last tile + in-kernel row mask).
    N2, C2 = 13, 32
    outputs2 = jax.random.normal(k2_out, (N2, C2), dtype=jnp.float32)
    labels2 = jax.random.randint(k2_lab, (N2,), 0, C2, dtype=jnp.int32)
    err2 = topk_error(labels2, outputs2, k=3, percent=True)
    jax.block_until_ready(err2)
    ref2 = _reference_topk_error(labels2, outputs2, k=3, percent=True)
    assert abs(float(err2) - ref2) < 1e-4, (float(err2), ref2)

    # Case 3: bf16 logits (exercises the 16-row sublane rounding + native-dtype
    # streaming).  Scores are per-row permutations of 0..C-1 so there are no
    # ties and the strict-count rule matches top_k exactly.
    N3, C3 = 24, 32
    base = jnp.tile(jnp.arange(C3, dtype=jnp.float32)[None, :], (N3, 1))
    outputs3 = jax.random.permutation(k3_out, base, axis=1,
                                      independent=True).astype(jnp.bfloat16)
    labels3 = jax.random.randint(k3_lab, (N3,), 0, C3, dtype=jnp.int32)
    err3 = topk_error(labels3, outputs3, k=2, percent=False)
    jax.block_until_ready(err3)
    ref3 = _reference_topk_error(labels3, outputs3, k=2, percent=False)
    assert abs(float(err3) - ref3) < 1e-4, (float(err3), ref3)

    print("KERNEL_OK")
</pallas_src>

<mosaic_0001>
module attributes {stable_mosaic.version = 11 : i64} {
  func.func @_topk_error_partial_kernel(%arg0: i32, %arg1: memref<8x1xi32, #tpu.memory_space<vmem>>, %arg2: memref<8x32xf32, #tpu.memory_space<vmem>>, %arg3: memref<1x8x128xf32, #tpu.memory_space<vmem>>) attributes {dimension_semantics = [#tpu.dimension_semantics<parallel>], iteration_bounds = array<i64: 2>, scalar_prefetch = 0 : i64, scratch_operands = 0 : i64, tpu.core_type = #tpu.core_type<tc>, window_params = [{transform_indices = @transform_0, window_bounds = array<i64: 8, 1>}, {transform_indices = @transform_1, window_bounds = array<i64: 8, 32>}, {transform_indices = @transform_2, window_bounds = array<i64: 1, 8, 128>}]} {
    %c0 = arith.constant 0 : index
    %c0_0 = arith.constant 0 : index
    %0 = vector.load %arg1[%c0, %c0_0] : memref<8x1xi32, #tpu.memory_space<vmem>>, vector<8x1xi32>
    %c0_1 = arith.constant 0 : index
    %c0_2 = arith.constant 0 : index
    %1 = vector.load %arg2[%c0_1, %c0_2] : memref<8x32xf32, #tpu.memory_space<vmem>>, vector<8x32xf32>
    %2 = tpu.iota {dimensions = array<i32: 1>} : vector<8x32xi32>
    %3 = vector.broadcast %0 : vector<8x1xi32> to vector<8x32xi32>
    %4 = arith.cmpi eq, %2, %3 : vector<8x32xi32>
    %cst = arith.constant 0xFF800000 : f32
    %5 = vector.broadcast %cst : f32 to vector<8x32xf32>
    %6 = arith.select %4, %1, %5 : vector<8x32xi1>, vector<8x32xf32>
    %cst_3 = arith.constant dense<0xFF800000> : vector<8xf32>
    %7 = vector.multi_reduction <maximumf>, %6, %cst_3 [1] : vector<8x32xf32> to vector<8xf32>
    %8 = vector.shape_cast %7 : vector<8xf32> to vector<8x1xf32>
    %9 = vector.broadcast %8 : vector<8x1xf32> to vector<8x32xf32>
    %10 = arith.cmpf ogt, %1, %9 : vector<8x32xf32>
    %11 = arith.extui %10 : vector<8x32xi1> to vector<8x32xi32>
    %cst_4 = arith.constant dense<0> : vector<8xi32>
    %12 = vector.multi_reduction <add>, %11, %cst_4 [1] : vector<8x32xi32> to vector<8xi32>
    %13 = vector.shape_cast %12 : vector<8xi32> to vector<8x1xi32>
    %c1_i32 = arith.constant 1 : i32
    %14 = vector.broadcast %c1_i32 : i32 to vector<8x1xi32>
    %15 = arith.cmpi slt, %13, %14 : vector<8x1xi32>
    %16 = arith.extui %15 : vector<8x1xi1> to vector<8x1xi32>
    %17 = arith.sitofp %16 : vector<8x1xi32> to vector<8x1xf32>
    %18 = vector.shape_cast %17 : vector<8x1xf32> to vector<1x8x1xf32>
    %cst_5 = arith.constant dense<0.000000e+00> : vector<1xf32>
    %19 = vector.multi_reduction <add>, %18, %cst_5 [1, 2] : vector<1x8x1xf32> to vector<1xf32>
    %20 = vector.shape_cast %19 : vector<1xf32> to vector<1x1x1xf32>
    %21 = vector.extract %20[0, 0, 0] : f32 from vector<1x1x1xf32>
    %cst_6 = arith.constant 0.000000e+00 : f32
    %22 = vector.broadcast %cst_6 : f32 to vector<1x8x128xf32>
    %23 = vector.broadcast %21 : f32 to vector<1x8x128xf32>
    %24 = arith.addf %22, %23 : vector<1x8x128xf32>
    %c0_7 = arith.constant 0 : index
    %c0_8 = arith.constant 0 : index
    %c0_9 = arith.constant 0 : index
    %25 = vector.load %arg3[%c0_7, %c0_8, %c0_9] : memref<1x8x128xf32, #tpu.memory_space<vmem>>, vector<1x8x128xf32>
    tpu.vector_store %arg3[%c0_7, %c0_8, %c0_9], %24 {strides = array<i32>} : memref<1x8x128xf32, #tpu.memory_space<vmem>>, vector<1x8x128xf32>,
    return
  }
  func.func @transform_0(%arg0: i32) -> (i32, i32) {
    %c0_i32 = arith.constant 0 : i32
    %c0_i32_0 = arith.constant 0 : i32
    return %arg0, %c0_i32 : i32, i32
  }
  func.func @transform_1(%arg0: i32) -> (i32, i32) {
    %c0_i32 = arith.constant 0 : i32
    %c0_i32_0 = arith.constant 0 : i32
    return %arg0, %c0_i32 : i32, i32
  }
  func.func @transform_2(%arg0: i32) -> (i32, i32, i32) {
    %c0_i32 = arith.constant 0 : i32
    %c0_i32_0 = arith.constant 0 : i32
    %c0_i32_1 = arith.constant 0 : i32
    return %arg0, %c0_i32, %c0_i32_0 : i32, i32, i32
  }
}

</mosaic_0001>

<llo_original>
// kernel: tpu_custom_call.1
$region0: #{tpu_custom_call.1}
  #allocation0 [shape = 'u32[]', space=smem, size = 0x4, offset = 0x4, fixed_abs, tag = 'smem constant byte address 0x4 - core index']
  #allocation1 [shape = 'u32[144,128]{1,0:T(1,128)}', space=vmem, size = 0x12000, scoped, tag = 'internal scratch']
  %s0 = inlined_call_operand.vmem [shape: s32[16,1], index: 0, kind: input, shape index: {}]
  %s1 = inlined_call_operand.vmem [shape: f32[16,32], index: 1, kind: input, shape index: {}]
  %s2 = inlined_call_operand.hbm [shape: f32[2,8,128], index: 2, kind: output, shape index: {}]
  %s3 = sld [smem:[#allocation0]]
  $region41: #{tpu_custom_call.1} parent=0
    _
  %s5 = ssub.s32 1, %s3
  %s6 = scalar_select 0, %s5, %s3
  $region1: #{tpu_custom_call.1} parent=0
    #allocation2 [shape = 'u8[8192]{0}', space=vmem, size = 0x2000, scoped, tag = 'output window, operand 0']
    #allocation3 [shape = 's32[2]{0}', space=sflag, size = 0x8, scoped, tag = 'scoped memory for tpu_custom_call.1']
    %7 = vsyncpa [#allocation3], 0
    %s8 = scalar_lea.sflag [#allocation3], 1
    %9 = vsyncpa %s8, 0
    loop: start=0, step=1, limit=4
    $region2: #{tpu_custom_call.1} parent=1 // loop_pre_header
      _
    $region3: #{tpu_custom_call.1} parent=1 // loop_header
      %s11 = sphi 0, %s15
      %p12 = scmp.ge.s32.totalorder %s11, 4
      %s21 = sphi 0, %s23
      %s24 = sphi 0, %s21
      %s25 = sphi 0, %s24
      %s41 = sphi 0, %s25
      %s47 = sphi 0, %s49
      %s50 = sphi 0, %s47
      %s51 = sphi 0, %s50
      %s67 = sphi 0, %s51
      %s73 = sphi 0, %s75
      %s76 = sphi 0, %s73
      %s77 = sphi 0, %s76
      %s93 = sphi 0, %s77
    $region4: #{tpu_custom_call.1} parent=1 // loop_header_branch
      %14 = sbr.rel (%p12) target = $region8
    $region5: #{tpu_custom_call.1} parent=1 // loop_body
      %s16 = ssub.s32 %s11, 1
      %s17 = ssub.s32 %s11, 2
      %s18 = sadd.s32 %s11, 1
      %s19 = ssub.s32 %s11, %s18
      %p20 = scmp.eq.s32.totalorder %s19, 0
      %s22 = sadd.s32 %s21, 1
      %s23 = scalar_select %p20, %s21, %s22
      %p26 = pneg %p20
      %p27 = scmp.eq.s32.totalorder %s11, 1
      %p28 = por %p26, %p27
      %p29 = scmp.ne.s32.totalorder %s21, %s24
      %p30 = scmp.eq.s32.totalorder %s11, 0
      %p31 = por %p29, %p30
      %p32 = scmp.ne.s32.totalorder %s21, %s24
      %p33 = scmp.eq.s32.totalorder %s16, 1
      %p34 = por %p32, %p33
      %p35 = scmp.ne.s32.totalorder %s24, %s25
      %p36 = scmp.eq.s32.totalorder %s16, 0
      %p37 = por %p35, %p36
      %p38 = scmp.ne.s32.totalorder %s24, %s25
      %p39 = scmp.eq.s32.totalorder %s17, 1
      %p40 = por %p38, %p39
      %p42 = scmp.ne.s32.totalorder %s25, %s41
      %p43 = scmp.eq.s32.totalorder %s17, 0
      %p44 = por %p42, %p43
      %s45 = ssub.s32 %s11, %s18
      %p46 = scmp.eq.s32.totalorder %s45, 0
      %s48 = sadd.s32 %s47, 1
      %s49 = scalar_select %p46, %s47, %s48
      %p52 = pneg %p46
      %p53 = scmp.eq.s32.totalorder %s11, 1
      %p54 = por %p52, %p53
      %p55 = scmp.ne.s32.totalorder %s47, %s50
      %p56 = scmp.eq.s32.totalorder %s11, 0
      %p57 = por %p55, %p56
      %p58 = scmp.ne.s32.totalorder %s47, %s50
      %p59 = scmp.eq.s32.totalorder %s16, 1
      %p60 = por %p58, %p59
      %p61 = scmp.ne.s32.totalorder %s50, %s51
      %p62 = scmp.eq.s32.totalorder %s16, 0
      %p63 = por %p61, %p62
      %p64 = scmp.ne.s32.totalorder %s50, %s51
      %p65 = scmp.eq.s32.totalorder %s17, 1
      %p66 = por %p64, %p65
      %p68 = scmp.ne.s32.totalorder %s51, %s67
      %p69 = scmp.eq.s32.totalorder %s17, 0
      %p70 = por %p68, %p69
      %s71 = ssub.s32 %s11, %s18
      %p72 = scmp.eq.s32.totalorder %s71, 0
      %s74 = sadd.s32 %s73, 1
      %s75 = scalar_select %p72, %s73, %s74
      %p78 = pneg %p72
      %p79 = scmp.eq.s32.totalorder %s11, 1
      %p80 = por %p78, %p79
      %p81 = scmp.ne.s32.totalorder %s73, %s76
      %p82 = scmp.eq.s32.totalorder %s11, 0
      %p83 = por %p81, %p82
      %p84 = scmp.ne.s32.totalorder %s73, %s76
      %p85 = scmp.eq.s32.totalorder %s16, 1
      %p86 = por %p84, %p85
      %p87 = scmp.ne.s32.totalorder %s76, %s77
      %p88 = scmp.eq.s32.totalorder %s16, 0
      %p89 = por %p87, %p88
      %p90 = scmp.ne.s32.totalorder %s76, %s77
      %p91 = scmp.eq.s32.totalorder %s17, 1
      %p92 = por %p90, %p91
      %p94 = scmp.ne.s32.totalorder %s77, %s93
      %p95 = scmp.eq.s32.totalorder %s17, 0
      %p96 = por %p94, %p95
      %p97 = scmp.le.s32.totalorder 1, %s11
      %p98 = scmp.lt.s32.totalorder %s11, 3
      %p99 = pnand %p97, %p98
      %p100 = pneg %p99
      // Predicated region
      $region9: #{tpu_custom_call.1} parent=5 // pred_check
        _
      $region10: #{tpu_custom_call.1} parent=5 // pred_check_branch
        %102 = sbr.rel (%p99) target = $region12
      $region11: #{tpu_custom_call.1} parent=5 // pred_region
        %s103 = ssub.s32 %s11, 1
      $region12: #{tpu_custom_call.1} parent=5 // pred_fallthru
        _
      %p104 = scmp.lt.s32.totalorder %s11, 2
      // Predicated region
      $region13: #{tpu_custom_call.1} parent=5 // pred_check
        %p105 = pneg %p104
      $region14: #{tpu_custom_call.1} parent=5 // pred_check_branch
        %107 = sbr.rel (%p105) target = $region16
      $region15: #{tpu_custom_call.1} parent=5 // pred_region
        // Predicated region
        $region17: #{tpu_custom_call.1} parent=15 // pred_check
          %p108 = pneg %p31
        $region18: #{tpu_custom_call.1} parent=15 // pred_check_branch
          %110 = sbr.rel (%p108) target = $region20
        $region19: #{tpu_custom_call.1} parent=15 // pred_region
          %p111 = scmp.lt.s32.totalorder %s11, 1
          %s112 = scalar_select %p111, %s11, 1
          %s113 = smul.addr %s112, 8
          %s114 = scalar_lea.vmem %s0, %s113
        $region20: #{tpu_custom_call.1} parent=15 // pred_fallthru
          _
        // Predicated region
        $region21: #{tpu_custom_call.1} parent=15 // pred_check
          %p115 = pneg %p57
        $region22: #{tpu_custom_call.1} parent=15 // pred_check_branch
          %117 = sbr.rel (%p115) target = $region24
        $region23: #{tpu_custom_call.1} parent=15 // pred_region
          %p118 = scmp.lt.s32.totalorder %s11, 1
          %s119 = scalar_select %p118, %s11, 1
          %s120 = smul.addr %s119, 8
          %s121 = scalar_lea.vmem %s1, %s120
        $region24: #{tpu_custom_call.1} parent=15 // pred_fallthru
          _
      $region16: #{tpu_custom_call.1} parent=5 // pred_fallthru
        _
      %p122 = scmp.le.s32.totalorder 1, %s11
      %p123 = scmp.lt.s32.totalorder %s11, 3
      %p124 = pnand %p122, %p123
      %p125 = pneg %p124
      // Predicated region
      $region25: #{tpu_custom_call.1} parent=5 // pred_check
        _
      $region26: #{tpu_custom_call.1} parent=5 // pred_check_branch
        %127 = sbr.rel (%p124) target = $region28
      $region27: #{tpu_custom_call.1} parent=5 // pred_region
        %s128 = ssub.s32 %s11, 1
        %p129 = scmp.lt.s32.totalorder %s16, 1
        %s130 = scalar_select %p129, %s16, 1
        %s131 = smul.addr %s130, 8
        %s132 = scalar_lea.vmem %s0, %s131
        %p133 = pneg %p37
        %p134 = pneg %p34
        %p135 = scmp.lt.s32.totalorder %s16, 1
        %s136 = scalar_select %p135, %s16, 1
        %s137 = smul.addr %s136, 8
        %s138 = scalar_lea.vmem %s1, %s137
        %p139 = pneg %p63
        %p140 = pneg %p60
        %p141 = pneg %p89
        %p142 = pneg %p86
        %s143 = sand.u32 %s76, 1
        %s144 = scalar_lea.sflag [#allocation3], %s143
        %s145 = sand.u32 %s76, 1
        %s146 = smul.addr %s145, 8
        %s147 = scalar_lea.vmem [#allocation2], %s146
        %p148 = scmp.lt.s32.totalorder %s16, 1
        %s149 = scalar_select %p148, %s16, 1
        %s150 = smul.addr %s149, 8
        %s151 = scalar_lea.vmem %s0, %s150
        %p152 = scmp.lt.s32.totalorder %s16, 1
        %s153 = scalar_select %p152, %s16, 1
        %s154 = smul.addr %s153, 8
        %s155 = scalar_lea.vmem %s1, %s154
        %v156 = vld [vmem:[%s151] sm:$0xff]
        %v157 = vld [vmem:[%s155] sm:$0xff]
        %v158 = vlaneseq
        %v159 = vand.u32 %v158, 127
        %160 = vset.pattern.permute.xlu0 0
        %161 = vperm.xlu0 %160, %v156
        %v162 = vpop.permute.xlu0 %161
        %vm163 = vcmp.eq.s32.totalorder %v159, %v162
        %v164 = vsel %vm163, %v157, -inf
        %vm165 = vcmask 261120
        %v166 = vsel %vm165, %v164, -inf
        %167 = vmax.xlane.f32.xlu0 %v166
        %v168 = vpop.xlane.xlu0 %167
        %vm169 = vcmp.gt.f32.partialorder %v157, %v168
        %v170 = vsel %vm169, 1, 0
        %v171 = vsel %vm165, %v170, 0
        %v172 = vand.u32 %v171, 65535
        %v173 = vshrl.u32 %v171, 16
        %v174 = vcvt.s32.f32 %v172
        %v175 = vcvt.s32.f32 %v173
        %176 = vadd.xlane.f32.xlu0 %v174
        %v177 = vpop.xlane.xlu0 %176
        %178 = vadd.xlane.f32.xlu0 %v175
        %v179 = vpop.xlane.xlu0 %178
        %v180 = vcvt.f32.s32 %v177
        %v181 = vcvt.f32.s32 %v179
        %v182 = vshll.u32 %v181, 16
        %v183 = vadd.s32 %v182, %v180
        %vm184 = vcmp.lt.s32.totalorder %v183, 1
        %v185 = vsel %vm184, 1, 0
        %v186 = vcvt.s32.f32 %v185
        %vm187 = vcmask 7168
        %v188 = vsel %vm187, %v186, 0.0
        %189 = vadd.xlane.f32.xlu0 %v188
        %v190 = vpop.xlane.xlu0 %189
        %v191 = vrot.slane %v190, 4
        %v192 = vadd.f32 %v190, %v191
        %v193 = vrot.slane %v192, 2
        %v194 = vadd.f32 %v192, %v193
        %v195 = vrot.slane %v194, 1
        %v196 = vadd.f32 %v194, %v195
        %s197 = vtos %v196
        %v198 = vstv %s197
        %v199 = vadd.f32 %v198, 0.0
        %200 = vst [vmem:[%s147] sm:$0xff] %v199
        %s201 = sand.u32 %s76, 1
        %s202 = scalar_lea.sflag [#allocation3], %s201
        %s203 = sand.u32 %s76, 1
        %s204 = smul.addr %s203, 8
        %s205 = scalar_lea.vmem [#allocation2], %s204
        // Predicated region
        $region29: #{tpu_custom_call.1} parent=27 // pred_check
          %p206 = pneg %p86
        $region30: #{tpu_custom_call.1} parent=27 // pred_check_branch
          %208 = sbr.rel (%p206) target = $region32
        $region31: #{tpu_custom_call.1} parent=27 // pred_region
          %s210 = ssub.s32 128, 128
          %211 = vsyncadd %s202, %s210
          %s212 = smul.addr %s16, 128
          %s213 = scalar_lea.hbm %s2, %s212
          %s215 = sshll.u32 %s205, 4
          %s216 = int_to_ptr.vmem [resolvable:$true] %s215
          %218 = dma.vmem_to_hbm [thread:$0]  %s216, 128, %s213, %s202
        $region32: #{tpu_custom_call.1} parent=27 // pred_fallthru
          _
      $region28: #{tpu_custom_call.1} parent=5 // pred_fallthru
        _
      %p219 = scmp.le.s32.totalorder 2, %s11
      // Predicated region
      $region33: #{tpu_custom_call.1} parent=5 // pred_check
        %p220 = pneg %p219
      $region34: #{tpu_custom_call.1} parent=5 // pred_check_branch
        %222 = sbr.rel (%p220) target = $region36
      $region35: #{tpu_custom_call.1} parent=5 // pred_region
        %s223 = ssub.s32 %s11, 2
        // Predicated region
        $region37: #{tpu_custom_call.1} parent=35 // pred_check
          %p224 = pneg %p92
        $region38: #{tpu_custom_call.1} parent=35 // pred_check_branch
          %226 = sbr.rel (%p224) target = $region40
        $region39: #{tpu_custom_call.1} parent=35 // pred_region
          %s227 = sand.u32 %s77, 1
          %s228 = scalar_lea.sflag [#allocation3], %s227
          %s229 = sand.u32 %s77, 1
          %s230 = smul.addr %s229, 8
          %s231 = scalar_lea.vmem [#allocation2], %s230
          %232 = dma.done %s228, 128
        $region40: #{tpu_custom_call.1} parent=35 // pred_fallthru
          _
      $region36: #{tpu_custom_call.1} parent=5 // pred_fallthru
        _
    $region6: #{tpu_custom_call.1} parent=1 // loop_footer
      %s15 = sadd.s32 1, %s11
    $region7: #{tpu_custom_call.1} parent=1 // loop_footer_branch
      %10 = sbr.rel target = $region3
    $region8: #{tpu_custom_call.1} parent=1 // loop_exit
      _
    %233 = vsyncpa [#allocation3], 1
    %s234 = scalar_lea.sflag [#allocation3], 1
    %235 = vsyncpa %s234, 1

</llo_original>
